<compile_context>
chip_gen: v5e
topology: v5e:2x2
jax: 0.10.0
libtpu: 0.0.40
codegen_flags: <defaults>
</compile_context>

<pallas_src>
import functools

import jax
import jax.numpy as jnp
from jax.experimental import pallas as pl
from jax.experimental.pallas import tpu as pltpu


def _infonce_kernel(a_ref, p_ref, n_ref, out_ref, *, inv_temperature, n_rows, tile_n):
    # Load native-dtype tiles and upcast in-registers.
    a = a_ref[...].astype(jnp.float32) * jnp.float32(inv_temperature)  # (TN, d), 1/T folded in
    p = p_ref[...].astype(jnp.float32)                                  # (TN, d)
    neg = n_ref[...].astype(jnp.float32)                                # (TN, M, d)

    # Row-validity mask for a (possibly) partial final tile.
    row = pl.program_id(0) * tile_n + jax.lax.broadcasted_iota(
        jnp.int32, (tile_n, 1), 0)
    valid = row < n_rows                                                # (TN, 1)

    # Positive similarities: sum(anchors * positives, -1) / T  -> (TN, 1)
    pos_sim = jnp.sum(a * p, axis=-1, keepdims=True)

    # Negative similarities: batched matvec on the VPU/XLU path -> (TN, M)
    neg_sim = jnp.sum(a[:, None, :] * neg, axis=-1)

    # Row-wise numerically stable logsumexp over [pos, neg_0..neg_{M-1}].
    m = jnp.maximum(pos_sim, jnp.max(neg_sim, axis=-1, keepdims=True))  # (TN, 1)
    sum_exp = jnp.exp(pos_sim - m) + jnp.sum(
        jnp.exp(neg_sim - m), axis=-1, keepdims=True)                   # (TN, 1)
    lse = m + jnp.log(sum_exp)                                          # (TN, 1)

    zero = jnp.float32(0.0)
    pos_m = jnp.where(valid, pos_sim, zero)
    lse_m = jnp.where(valid, lse, zero)

    # Per-tile partial sums (means are taken in the wrapper).
    pos_partial = jnp.sum(-pos_m)          # sum(-pos_similarities)
    lse_partial = jnp.sum(lse_m)           # sum(logsumexp)
    loss_partial = jnp.sum(lse_m - pos_m)  # sum(cross_entropy per-row, target 0)

    # Lane-dense (8, 128) output block: row 0 = pos, row 1 = lse, row 2 = loss.
    sub = jax.lax.broadcasted_iota(jnp.int32, (8, 128), 0)
    out_ref[...] = jnp.where(sub == 0, pos_partial,
                   jnp.where(sub == 1, lse_partial,
                   jnp.where(sub == 2, loss_partial, zero)))


def _choose_tile_n(n, m, d, itemsize, target_bytes=2 << 20):
    """Largest sublane-aligned row tile keeping the negatives block ~target_bytes."""
    rows = max(1, target_bytes // max(1, m * d * itemsize))
    if rows >= n:
        return n                       # whole batch fits -> block dim == array dim
    tn = max(8, (rows // 8) * 8)       # sublane-aligned
    return min(tn, n)


def infonce_loss_adjusted(anchors, positives, negatives, temperature=0.1):
    """Returns (pos_component, neg_component, total_loss) as JAX f32 scalars."""
    N, d = anchors.shape
    N_pos, d_pos = positives.shape
    N_neg, M, d_neg = negatives.shape
    assert N == N_pos == N_neg, f'Batch sizes must match: {N}, {N_pos}, {N_neg}'
    assert d == d_pos == d_neg, f'Embedding dims must match: {d}, {d_pos}, {d_neg}'

    itemsize = jnp.dtype(negatives.dtype).itemsize
    TN = _choose_tile_n(N, M, d, itemsize)
    num_tiles = pl.cdiv(N, TN)

    kernel = functools.partial(
        _infonce_kernel,
        inv_temperature=1.0 / float(temperature),
        n_rows=N,
        tile_n=TN,
    )

    out = pl.pallas_call(
        kernel,
        out_shape=jax.ShapeDtypeStruct((num_tiles * 8, 128), jnp.float32),
        grid=(num_tiles,),
        in_specs=[
            pl.BlockSpec((TN, d), lambda i: (i, 0)),
            pl.BlockSpec((TN, d), lambda i: (i, 0)),
            pl.BlockSpec((TN, M, d), lambda i: (i, 0, 0)),
        ],
        out_specs=pl.BlockSpec((8, 128), lambda i: (i, 0)),
        compiler_params=pltpu.CompilerParams(
            dimension_semantics=("parallel",),          # megacore-shardable on v7x
            vmem_limit_bytes=48 * 1024 * 1024,          # safe on v7x (64 MiB phys)
        ),
    )(anchors, positives, negatives)

    partials = out.reshape(num_tiles, 8, 128)
    inv_n = jnp.float32(1.0 / N)
    pos_component = jnp.sum(partials[:, 0, 0]) * inv_n
    neg_component = jnp.sum(partials[:, 1, 0]) * inv_n
    total_loss = jnp.sum(partials[:, 2, 0]) * inv_n
    return pos_component, neg_component, total_loss


def _reference(anchors, positives, negatives, temperature=0.1):
    a = anchors.astype(jnp.float32)
    p = positives.astype(jnp.float32)
    n = negatives.astype(jnp.float32)
    pos = jnp.sum(a * p, axis=1) / temperature
    neg = jnp.einsum('nd,nmd->nm', a, n) / temperature
    all_sim = jnp.concatenate([pos[:, None], neg], axis=1)
    lse = jax.scipy.special.logsumexp(all_sim, axis=1)
    return jnp.mean(-pos), jnp.mean(lse), jnp.mean(lse - all_sim[:, 0])


if __name__ == "__main__":
    key = jax.random.PRNGKey(0)
    k1, k2, k3 = jax.random.split(key, 3)

    N, M, d = 8, 8, 32
    anchors = jax.random.normal(k1, (N, d), dtype=jnp.float32)
    positives = jax.random.normal(k2, (N, d), dtype=jnp.float32)
    negatives = jax.random.normal(k3, (N, M, d), dtype=jnp.float32)

    # f32 path
    pos_c, neg_c, total_loss = infonce_loss_adjusted(
        anchors, positives, negatives, temperature=0.1)
    total_loss = jax.block_until_ready(total_loss)
    ref_pos, ref_neg, ref_loss = _reference(anchors, positives, negatives, 0.1)
    assert abs(float(pos_c) - float(ref_pos)) < 1e-3, (pos_c, ref_pos)
    assert abs(float(neg_c) - float(ref_neg)) < 1e-3, (neg_c, ref_neg)
    assert abs(float(total_loss) - float(ref_loss)) < 1e-3, (total_loss, ref_loss)

    # bf16 path (no wrapper upcast -> half the HBM bytes for the negatives stream)
    a16 = anchors.astype(jnp.bfloat16)
    p16 = positives.astype(jnp.bfloat16)
    n16 = negatives.astype(jnp.bfloat16)
    pos_c16, neg_c16, loss16 = infonce_loss_adjusted(a16, p16, n16, temperature=0.1)
    loss16 = jax.block_until_ready(loss16)
    r_pos16, r_neg16, r_loss16 = _reference(a16, p16, n16, 0.1)
    assert abs(float(pos_c16) - float(r_pos16)) < 5e-2, (pos_c16, r_pos16)
    assert abs(float(neg_c16) - float(r_neg16)) < 5e-2, (neg_c16, r_neg16)
    assert abs(float(loss16) - float(r_loss16)) < 5e-2, (loss16, r_loss16)

    print("KERNEL_OK")
</pallas_src>

<mosaic_0001>
module attributes {stable_mosaic.version = 11 : i64} {
  func.func @_infonce_kernel(%arg0: i32, %arg1: memref<8x32xf32, #tpu.memory_space<vmem>>, %arg2: memref<8x32xf32, #tpu.memory_space<vmem>>, %arg3: memref<8x8x32xf32, #tpu.memory_space<vmem>>, %arg4: memref<8x128xf32, #tpu.memory_space<vmem>>) attributes {dimension_semantics = [#tpu.dimension_semantics<parallel>], iteration_bounds = array<i64: 1>, scalar_prefetch = 0 : i64, scratch_operands = 0 : i64, tpu.core_type = #tpu.core_type<tc>, window_params = [{transform_indices = @transform_0, window_bounds = array<i64: 8, 32>}, {transform_indices = @transform_1, window_bounds = array<i64: 8, 32>}, {transform_indices = @transform_2, window_bounds = array<i64: 8, 8, 32>}, {transform_indices = @transform_3, window_bounds = array<i64: 8, 128>}]} {
    %c0 = arith.constant 0 : index
    %c0_0 = arith.constant 0 : index
    %0 = vector.load %arg1[%c0, %c0_0] : memref<8x32xf32, #tpu.memory_space<vmem>>, vector<8x32xf32>
    %cst = arith.constant 1.000000e+01 : f32
    %1 = vector.broadcast %cst : f32 to vector<8x32xf32>
    %2 = arith.mulf %0, %1 : vector<8x32xf32>
    %c0_1 = arith.constant 0 : index
    %c0_2 = arith.constant 0 : index
    %3 = vector.load %arg2[%c0_1, %c0_2] : memref<8x32xf32, #tpu.memory_space<vmem>>, vector<8x32xf32>
    %c0_3 = arith.constant 0 : index
    %c0_4 = arith.constant 0 : index
    %c0_5 = arith.constant 0 : index
    %4 = vector.load %arg3[%c0_3, %c0_4, %c0_5] : memref<8x8x32xf32, #tpu.memory_space<vmem>>, vector<8x8x32xf32>
    %c8_i32 = arith.constant 8 : i32
    %5 = arith.muli %arg0, %c8_i32 : i32
    %6 = tpu.iota {dimensions = array<i32: 0>} : vector<8x1xi32>
    %7 = vector.broadcast %5 : i32 to vector<8x1xi32>
    %8 = arith.addi %7, %6 : vector<8x1xi32>
    %c8_i32_6 = arith.constant 8 : i32
    %9 = vector.broadcast %c8_i32_6 : i32 to vector<8x1xi32>
    %10 = arith.cmpi slt, %8, %9 : vector<8x1xi32>
    %11 = arith.mulf %2, %3 : vector<8x32xf32>
    %cst_7 = arith.constant dense<0.000000e+00> : vector<8xf32>
    %12 = vector.multi_reduction <add>, %11, %cst_7 [1] : vector<8x32xf32> to vector<8xf32>
    %13 = vector.shape_cast %12 : vector<8xf32> to vector<8x1xf32>
    %14 = vector.shape_cast %2 : vector<8x32xf32> to vector<8x1x32xf32>
    %15 = vector.broadcast %14 : vector<8x1x32xf32> to vector<8x8x32xf32>
    %16 = arith.mulf %15, %4 : vector<8x8x32xf32>
    %cst_8 = arith.constant dense<0.000000e+00> : vector<8x8xf32>
    %17 = vector.multi_reduction <add>, %16, %cst_8 [2] : vector<8x8x32xf32> to vector<8x8xf32>
    %cst_9 = arith.constant dense<0xFF800000> : vector<8xf32>
    %18 = vector.multi_reduction <maximumf>, %17, %cst_9 [1] : vector<8x8xf32> to vector<8xf32>
    %19 = vector.shape_cast %18 : vector<8xf32> to vector<8x1xf32>
    %20 = arith.maximumf %13, %19 : vector<8x1xf32>
    %21 = arith.subf %13, %20 : vector<8x1xf32>
    %22 = math.exp %21 : vector<8x1xf32>
    %23 = vector.broadcast %20 : vector<8x1xf32> to vector<8x8xf32>
    %24 = arith.subf %17, %23 : vector<8x8xf32>
    %25 = math.exp %24 : vector<8x8xf32>
    %cst_10 = arith.constant dense<0.000000e+00> : vector<8xf32>
    %26 = vector.multi_reduction <add>, %25, %cst_10 [1] : vector<8x8xf32> to vector<8xf32>
    %27 = vector.shape_cast %26 : vector<8xf32> to vector<8x1xf32>
    %28 = arith.addf %22, %27 : vector<8x1xf32>
    %29 = math.log %28 : vector<8x1xf32>
    %30 = arith.addf %20, %29 : vector<8x1xf32>
    %cst_11 = arith.constant 0.000000e+00 : f32
    %31 = vector.broadcast %cst_11 : f32 to vector<8x1xf32>
    %32 = arith.select %10, %13, %31 : vector<8x1xi1>, vector<8x1xf32>
    %cst_12 = arith.constant 0.000000e+00 : f32
    %33 = vector.broadcast %cst_12 : f32 to vector<8x1xf32>
    %34 = arith.select %10, %30, %33 : vector<8x1xi1>, vector<8x1xf32>
    %cst_13 = arith.constant 0.000000e+00 : f32
    %35 = vector.broadcast %cst_13 : f32 to vector<8x1xf32>
    %36 = arith.subf %35, %32 : vector<8x1xf32>
    %37 = vector.shape_cast %36 : vector<8x1xf32> to vector<1x8x1xf32>
    %cst_14 = arith.constant dense<0.000000e+00> : vector<1xf32>
    %38 = vector.multi_reduction <add>, %37, %cst_14 [1, 2] : vector<1x8x1xf32> to vector<1xf32>
    %39 = vector.shape_cast %38 : vector<1xf32> to vector<1x1x1xf32>
    %40 = vector.extract %39[0, 0, 0] : f32 from vector<1x1x1xf32>
    %41 = vector.shape_cast %34 : vector<8x1xf32> to vector<1x8x1xf32>
    %cst_15 = arith.constant dense<0.000000e+00> : vector<1xf32>
    %42 = vector.multi_reduction <add>, %41, %cst_15 [1, 2] : vector<1x8x1xf32> to vector<1xf32>
    %43 = vector.shape_cast %42 : vector<1xf32> to vector<1x1x1xf32>
    %44 = vector.extract %43[0, 0, 0] : f32 from vector<1x1x1xf32>
    %45 = arith.subf %34, %32 : vector<8x1xf32>
    %46 = vector.shape_cast %45 : vector<8x1xf32> to vector<1x8x1xf32>
    %cst_16 = arith.constant dense<0.000000e+00> : vector<1xf32>
    %47 = vector.multi_reduction <add>, %46, %cst_16 [1, 2] : vector<1x8x1xf32> to vector<1xf32>
    %48 = vector.shape_cast %47 : vector<1xf32> to vector<1x1x1xf32>
    %49 = vector.extract %48[0, 0, 0] : f32 from vector<1x1x1xf32>
    %50 = tpu.iota {dimensions = array<i32: 0>} : vector<8x128xi32>
    %c0_i32 = arith.constant 0 : i32
    %51 = vector.broadcast %c0_i32 : i32 to vector<8x128xi32>
    %52 = arith.cmpi eq, %50, %51 : vector<8x128xi32>
    %c1_i32 = arith.constant 1 : i32
    %53 = vector.broadcast %c1_i32 : i32 to vector<8x128xi32>
    %54 = arith.cmpi eq, %50, %53 : vector<8x128xi32>
    %c2_i32 = arith.constant 2 : i32
    %55 = vector.broadcast %c2_i32 : i32 to vector<8x128xi32>
    %56 = arith.cmpi eq, %50, %55 : vector<8x128xi32>
    %cst_17 = arith.constant 0.000000e+00 : f32
    %57 = vector.broadcast %49 : f32 to vector<8x128xf32>
    %58 = vector.broadcast %cst_17 : f32 to vector<8x128xf32>
    %59 = arith.select %56, %57, %58 : vector<8x128xi1>, vector<8x128xf32>
    %60 = vector.broadcast %44 : f32 to vector<8x128xf32>
    %61 = arith.select %54, %60, %59 : vector<8x128xi1>, vector<8x128xf32>
    %62 = vector.broadcast %40 : f32 to vector<8x128xf32>
    %63 = arith.select %52, %62, %61 : vector<8x128xi1>, vector<8x128xf32>
    %c0_18 = arith.constant 0 : index
    %c0_19 = arith.constant 0 : index
    %64 = vector.load %arg4[%c0_18, %c0_19] : memref<8x128xf32, #tpu.memory_space<vmem>>, vector<8x128xf32>
    tpu.vector_store %arg4[%c0_18, %c0_19], %63 {strides = array<i32>} : memref<8x128xf32, #tpu.memory_space<vmem>>, vector<8x128xf32>,
    return
  }
  func.func @transform_0(%arg0: i32) -> (i32, i32) {
    %c0_i32 = arith.constant 0 : i32
    %c0_i32_0 = arith.constant 0 : i32
    return %arg0, %c0_i32 : i32, i32
  }
  func.func @transform_1(%arg0: i32) -> (i32, i32) {
    %c0_i32 = arith.constant 0 : i32
    %c0_i32_0 = arith.constant 0 : i32
    return %arg0, %c0_i32 : i32, i32
  }
  func.func @transform_2(%arg0: i32) -> (i32, i32, i32) {
    %c0_i32 = arith.constant 0 : i32
    %c0_i32_0 = arith.constant 0 : i32
    %c0_i32_1 = arith.constant 0 : i32
    return %arg0, %c0_i32, %c0_i32_0 : i32, i32, i32
  }
  func.func @transform_3(%arg0: i32) -> (i32, i32) {
    %c0_i32 = arith.constant 0 : i32
    %c0_i32_0 = arith.constant 0 : i32
    return %arg0, %c0_i32 : i32, i32
  }
}

</mosaic_0001>

<llo_original>
// kernel: tpu_custom_call.1
$region0: #{tpu_custom_call.1}
  #allocation0 [shape = 'u32[]', space=smem, size = 0x4, offset = 0x4, fixed_abs, tag = 'smem constant byte address 0x4 - core index']
  #allocation1 [shape = 'u32[72,128]{1,0:T(1,128)}', space=vmem, size = 0x9000, scoped, tag = 'internal scratch']
  %s0 = inlined_call_operand.hbm [shape: f32[8,32], index: 0, kind: input, shape index: {}]
  %s1 = inlined_call_operand.hbm [shape: f32[8,32], index: 1, kind: input, shape index: {}]
  %s2 = inlined_call_operand.hbm [shape: f32[8,8,32], index: 2, kind: input, shape index: {}]
  %s3 = inlined_call_operand.hbm [shape: f32[8,128], index: 3, kind: output, shape index: {}]
  %s4 = sld [smem:[#allocation0]]
  $region34: #{tpu_custom_call.1} parent=0
    _
  %s6 = ssub.s32 1, %s4
  %s7 = scalar_select 0, %s6, %s4
  $region1: #{tpu_custom_call.1} parent=0
    #allocation2 [shape = 'u8[4096]{0}', space=vmem, size = 0x1000, scoped, tag = 'input window, operand 0, single buffered']
    #allocation3 [shape = 's32[1]{0}', space=sflag, size = 0x4, scoped, tag = 'scoped memory for tpu_custom_call.1']
    #allocation4 [shape = 's32[1]{0}', space=sflag, size = 0x4, scoped, tag = 'scoped memory for tpu_custom_call.1']
    #allocation5 [shape = 'u8[4096]{0}', space=vmem, size = 0x1000, scoped, tag = 'input window, operand 1, single buffered']
    #allocation6 [shape = 's32[1]{0}', space=sflag, size = 0x4, scoped, tag = 'scoped memory for tpu_custom_call.1']
    #allocation7 [shape = 'u8[32768]{0}', space=vmem, size = 0x8000, scoped, tag = 'input window, operand 2, single buffered']
    #allocation8 [shape = 'u8[4096]{0}', space=vmem, size = 0x1000, scoped, tag = 'output window, operand 0, single buffered']
    %8 = vsyncpa [#allocation3], 0
    %9 = vsyncpa [#allocation6], 0
    %10 = vsyncpa [#allocation4], 0
    // Predicated region
    $region2: #{tpu_custom_call.1} parent=1 // pred_check
      _
    $region3: #{tpu_custom_call.1} parent=1 // pred_check_branch
      %12 = sbr.rel (0) target = $region5
    $region4: #{tpu_custom_call.1} parent=1 // pred_region
      %14 = vsyncadd [#allocation3], 0
      %s16 = sshll.u32 %s0, 4
      %s17 = int_to_ptr.hbm [resolvable:$true] %s16
      %s18 = sshll.u32 [#allocation2], 4
      %s19 = int_to_ptr.vmem [resolvable:$true] %s18
      %21 = dma.hbm_to_vmem [thread:$0]  %s17, 128, %s19, [#allocation3]
    $region5: #{tpu_custom_call.1} parent=1 // pred_fallthru
      _
    // Predicated region
    $region6: #{tpu_custom_call.1} parent=1 // pred_check
      _
    $region7: #{tpu_custom_call.1} parent=1 // pred_check_branch
      %23 = sbr.rel (0) target = $region9
    $region8: #{tpu_custom_call.1} parent=1 // pred_region
      %25 = vsyncadd [#allocation6], 0
      %s27 = sshll.u32 %s1, 4
      %s28 = int_to_ptr.hbm [resolvable:$true] %s27
      %s29 = sshll.u32 [#allocation5], 4
      %s30 = int_to_ptr.vmem [resolvable:$true] %s29
      %32 = dma.hbm_to_vmem [thread:$0]  %s28, 128, %s30, [#allocation6]
    $region9: #{tpu_custom_call.1} parent=1 // pred_fallthru
      _
    // Predicated region
    $region10: #{tpu_custom_call.1} parent=1 // pred_check
      _
    $region11: #{tpu_custom_call.1} parent=1 // pred_check_branch
      %34 = sbr.rel (0) target = $region13
    $region12: #{tpu_custom_call.1} parent=1 // pred_region
      %36 = vsyncadd [#allocation6], 0
      %s37 = sshll.u32 %s2, 4
      %s38 = int_to_ptr.hbm [resolvable:$true] %s37
      %s39 = sshll.u32 [#allocation7], 4
      %s40 = int_to_ptr.vmem [resolvable:$true] %s39
      %45 = dma.hbm_to_vmem [thread:$0]  %s38, 1024, %s40, [#allocation6], 128, 128, 8
    $region13: #{tpu_custom_call.1} parent=1 // pred_fallthru
      _
    // Predicated region
    $region14: #{tpu_custom_call.1} parent=1 // pred_check
      _
    $region15: #{tpu_custom_call.1} parent=1 // pred_check_branch
      %47 = sbr.rel (0) target = $region17
    $region16: #{tpu_custom_call.1} parent=1 // pred_region
      %49 = dma.done [#allocation3], 128
    $region17: #{tpu_custom_call.1} parent=1 // pred_fallthru
      _
    // Predicated region
    $region18: #{tpu_custom_call.1} parent=1 // pred_check
      _
    $region19: #{tpu_custom_call.1} parent=1 // pred_check_branch
      %51 = sbr.rel (0) target = $region21
    $region20: #{tpu_custom_call.1} parent=1 // pred_region
      %53 = dma.done [#allocation6], 128
    $region21: #{tpu_custom_call.1} parent=1 // pred_fallthru
      _
    // Predicated region
    $region22: #{tpu_custom_call.1} parent=1 // pred_check
      _
    $region23: #{tpu_custom_call.1} parent=1 // pred_check_branch
      %55 = sbr.rel (0) target = $region25
    $region24: #{tpu_custom_call.1} parent=1 // pred_region
      %57 = dma.done [#allocation6], 1024
    $region25: #{tpu_custom_call.1} parent=1 // pred_fallthru
      _
    %v58 = vld [vmem:[#allocation2] sm:$0xff]
    %v59 = vmul.f32 %v58, 10.0
    %v60 = vld [vmem:[#allocation5] sm:$0xff]
    %v61 = vld [vmem:[#allocation7] sm:$0xff]
    %v62 = vld [vmem:[#allocation7 + $0x8] sm:$0xff]
    %v63 = vld [vmem:[#allocation7 + $0x10] sm:$0xff]
    %v64 = vld [vmem:[#allocation7 + $0x18] sm:$0xff]
    %v65 = vld [vmem:[#allocation7 + $0x20] sm:$0xff]
    %v66 = vld [vmem:[#allocation7 + $0x28] sm:$0xff]
    %v67 = vld [vmem:[#allocation7 + $0x30] sm:$0xff]
    %v68 = vld [vmem:[#allocation7 + $0x38] sm:$0xff]
    %s69 = smul.u32 0, 8
    %v70 = vlaneseq
    %v71 = vshrl.u32 %v70, 7
    %v72 = vstv %s69
    %v73 = vadd.s32 %v72, %v71
    %vm74 = vcmp.lt.s32.totalorder %v73, 8
    %v75 = vmul.f32 %v59, %v60
    %vm76 = vcmask 261120
    %v77 = vsel %vm76, %v75, 0.0
    %78 = vadd.xlane.f32.xlu0 %v77
    %v79 = vpop.xlane.xlu0 %78
    %v81 = vrot.slane %v59, 1
    %v82 = vrot.slane %v59, 2
    %v83 = vrot.slane %v59, 3
    %v84 = vrot.slane %v59, 4
    %v85 = vrot.slane %v59, 5
    %v86 = vrot.slane %v59, 6
    %v87 = vrot.slane %v59, 7
    %v88 = vperm.slane %v59, 0
    %v89 = vperm.slane %v81, 0
    %v90 = vperm.slane %v82, 0
    %v91 = vperm.slane %v83, 0
    %v92 = vperm.slane %v84, 0
    %v93 = vperm.slane %v85, 0
    %v94 = vperm.slane %v86, 0
    %v95 = vperm.slane %v87, 0
    %v104 = vmul.f32 %v88, %v61
    %v105 = vmul.f32 %v89, %v62
    %v106 = vmul.f32 %v90, %v63
    %v107 = vmul.f32 %v91, %v64
    %v108 = vmul.f32 %v92, %v65
    %v109 = vmul.f32 %v93, %v66
    %v110 = vmul.f32 %v94, %v67
    %v111 = vmul.f32 %v95, %v68
    %v112 = vsel %vm76, %v104, 0.0
    %113 = vadd.xlane.f32.xlu0 %v112
    %v114 = vpop.xlane.xlu0 %113
    %v115 = vsel %vm76, %v105, 0.0
    %116 = vadd.xlane.f32.xlu0 %v115
    %v117 = vpop.xlane.xlu0 %116
    %v118 = vsel %vm76, %v106, 0.0
    %119 = vadd.xlane.f32.xlu0 %v118
    %v120 = vpop.xlane.xlu0 %119
    %v121 = vsel %vm76, %v107, 0.0
    %122 = vadd.xlane.f32.xlu0 %v121
    %v123 = vpop.xlane.xlu0 %122
    %v124 = vsel %vm76, %v108, 0.0
    %125 = vadd.xlane.f32.xlu0 %v124
    %v126 = vpop.xlane.xlu0 %125
    %v127 = vsel %vm76, %v109, 0.0
    %128 = vadd.xlane.f32.xlu0 %v127
    %v129 = vpop.xlane.xlu0 %128
    %v130 = vsel %vm76, %v110, 0.0
    %131 = vadd.xlane.f32.xlu0 %v130
    %v132 = vpop.xlane.xlu0 %131
    %v133 = vsel %vm76, %v111, 0.0
    %134 = vadd.xlane.f32.xlu0 %v133
    %v135 = vpop.xlane.xlu0 %134
    %v144 = vlaneseq
    %v145 = vand.u32 %v144, 127
    %v146 = vperm.slane %v114, %v145
    %v147 = vperm.slane %v117, %v145
    %v148 = vperm.slane %v120, %v145
    %v149 = vperm.slane %v123, %v145
    %v150 = vperm.slane %v126, %v145
    %v151 = vperm.slane %v129, %v145
    %v152 = vperm.slane %v132, %v145
    %v153 = vperm.slane %v135, %v145
    %vm154 = vcmask 1041409
    %v155 = vsel %vm154, %v147, %v146
    %vm156 = vcmask 1042434
    %v157 = vsel %vm156, %v148, %v155
    %vm158 = vcmask 1043459
    %v159 = vsel %vm158, %v149, %v157
    %vm160 = vcmask 1044484
    %v161 = vsel %vm160, %v150, %v159
    %vm162 = vcmask 1045509
    %v163 = vsel %vm162, %v151, %v161
    %vm164 = vcmask 1046534
    %v165 = vsel %vm164, %v152, %v163
    %vm166 = vcmask 1047559
    %v167 = vsel %vm166, %v153, %v165
    %vm169 = vcmask 64512
    %v170 = vsel %vm169, %v167, -inf
    %171 = vmax.xlane.f32.xlu0 %v170
    %v172 = vpop.xlane.xlu0 %171
    %v173 = vmax.f32 %v79, %v172
    %v174 = vsub.f32 %v79, %v173
    %v175 = vmul.f32 %v174, 1.442695
    %v176 = vpow.pop %v175
    %v178 = vperm.slane %v173, 0
    %v179 = vperm.slane %v173, 1
    %v180 = vperm.slane %v173, 2
    %v181 = vperm.slane %v173, 3
    %v182 = vperm.slane %v173, 4
    %v183 = vperm.slane %v173, 5
    %v184 = vperm.slane %v173, 6
    %v185 = vperm.slane %v173, 7
    %v194 = vsub.f32 %v114, %v178
    %v195 = vsub.f32 %v117, %v179
    %v196 = vsub.f32 %v120, %v180
    %v197 = vsub.f32 %v123, %v181
    %v198 = vsub.f32 %v126, %v182
    %v199 = vsub.f32 %v129, %v183
    %v200 = vsub.f32 %v132, %v184
    %v201 = vsub.f32 %v135, %v185
    %v202 = vmul.f32 %v194, 1.442695
    %v203 = vpow.pop %v202
    %v204 = vmul.f32 %v195, 1.442695
    %v205 = vpow.pop %v204
    %v206 = vmul.f32 %v196, 1.442695
    %v207 = vpow.pop %v206
    %v208 = vmul.f32 %v197, 1.442695
    %v209 = vpow.pop %v208
    %v210 = vmul.f32 %v198, 1.442695
    %v211 = vpow.pop %v210
    %v212 = vmul.f32 %v199, 1.442695
    %v213 = vpow.pop %v212
    %v214 = vmul.f32 %v200, 1.442695
    %v215 = vpow.pop %v214
    %v216 = vmul.f32 %v201, 1.442695
    %v217 = vpow.pop %v216
    %226 = vset.pattern.permute.xlu0 0
    %227 = vperm.xlu0 %226, %v203
    %v228 = vpop.permute.xlu0 %227
    %229 = vset.pattern.permute.xlu0 0
    %230 = vperm.xlu0 %229, %v205
    %v231 = vpop.permute.xlu0 %230
    %232 = vset.pattern.permute.xlu0 0
    %233 = vperm.xlu0 %232, %v207
    %v234 = vpop.permute.xlu0 %233
    %235 = vset.pattern.permute.xlu0 0
    %236 = vperm.xlu0 %235, %v209
    %v237 = vpop.permute.xlu0 %236
    %238 = vset.pattern.permute.xlu0 0
    %239 = vperm.xlu0 %238, %v211
    %v240 = vpop.permute.xlu0 %239
    %241 = vset.pattern.permute.xlu0 0
    %242 = vperm.xlu0 %241, %v213
    %v243 = vpop.permute.xlu0 %242
    %244 = vset.pattern.permute.xlu0 0
    %245 = vperm.xlu0 %244, %v215
    %v246 = vpop.permute.xlu0 %245
    %247 = vset.pattern.permute.xlu0 0
    %248 = vperm.xlu0 %247, %v217
    %v249 = vpop.permute.xlu0 %248
    %v250 = vperm.slane %v228, %v145
    %v251 = vperm.slane %v231, %v145
    %v252 = vperm.slane %v234, %v145
    %v253 = vperm.slane %v237, %v145
    %v254 = vperm.slane %v240, %v145
    %v255 = vperm.slane %v243, %v145
    %v256 = vperm.slane %v246, %v145
    %v257 = vperm.slane %v249, %v145
    %v258 = vsel %vm154, %v251, %v250
    %v259 = vsel %vm156, %v252, %v258
    %v260 = vsel %vm158, %v253, %v259
    %v261 = vsel %vm160, %v254, %v260
    %v262 = vsel %vm162, %v255, %v261
    %v263 = vsel %vm164, %v256, %v262
    %v264 = vsel %vm166, %v257, %v263
    %v266 = vsel %vm169, %v264, 0.0
    %267 = vadd.xlane.f32.xlu0 %v266
    %v268 = vpop.xlane.xlu0 %267
    %v269 = vadd.f32 %v176, %v268
    %v270 = vlog2.pop %v269
    %v271 = vmul.f32 %v270, 0.6931472
    %v272 = vadd.f32 %v173, %v271
    %v273 = vsel %vm74, %v79, 0.0
    %v274 = vsel %vm74, %v272, 0.0
    %v275 = vsub.f32 0.0, %v273
    %vm276 = vcmask 7168
    %v277 = vsel %vm276, %v275, 0.0
    %278 = vadd.xlane.f32.xlu0 %v277
    %v279 = vpop.xlane.xlu0 %278
    %v280 = vrot.slane %v279, 4
    %v281 = vadd.f32 %v279, %v280
    %v282 = vrot.slane %v281, 2
    %v283 = vadd.f32 %v281, %v282
    %v284 = vrot.slane %v283, 1
    %v285 = vadd.f32 %v283, %v284
    %s286 = vtos %v285
    %v287 = vsel %vm276, %v274, 0.0
    %288 = vadd.xlane.f32.xlu0 %v287
    %v289 = vpop.xlane.xlu0 %288
    %v290 = vrot.slane %v289, 4
    %v291 = vadd.f32 %v289, %v290
    %v292 = vrot.slane %v291, 2
    %v293 = vadd.f32 %v291, %v292
    %v294 = vrot.slane %v293, 1
    %v295 = vadd.f32 %v293, %v294
    %s296 = vtos %v295
    %v297 = vsub.f32 %v274, %v273
    %v298 = vsel %vm276, %v297, 0.0
    %299 = vadd.xlane.f32.xlu0 %v298
    %v300 = vpop.xlane.xlu0 %299
    %v301 = vrot.slane %v300, 4
    %v302 = vadd.f32 %v300, %v301
    %v303 = vrot.slane %v302, 2
    %v304 = vadd.f32 %v302, %v303
    %v305 = vrot.slane %v304, 1
    %v306 = vadd.f32 %v304, %v305
    %s307 = vtos %v306
    %vm308 = vcmp.eq.s32.totalorder %v71, 0
    %vm309 = vcmp.eq.s32.totalorder %v71, 1
    %vm310 = vcmp.eq.s32.totalorder %v71, 2
    %v311 = vstv %s307
    %v312 = vsel %vm310, %v311, 0.0
    %v313 = vstv %s296
    %v314 = vsel %vm309, %v313, %v312
    %v315 = vstv %s286
    %v316 = vsel %vm308, %v315, %v314
    %317 = vst [vmem:[#allocation8] sm:$0xff] %v316
    // Predicated region
    $region26: #{tpu_custom_call.1} parent=1 // pred_check
      _
    $region27: #{tpu_custom_call.1} parent=1 // pred_check_branch
      %319 = sbr.rel (0) target = $region29
    $region28: #{tpu_custom_call.1} parent=1 // pred_region
      %321 = vsyncadd [#allocation4], 0
      %s323 = sshll.u32 [#allocation8], 4
      %s324 = int_to_ptr.vmem [resolvable:$true] %s323
      %s325 = sshll.u32 %s3, 4
      %s326 = int_to_ptr.hbm [resolvable:$true] %s325
      %328 = dma.vmem_to_hbm [thread:$0]  %s324, 128, %s326, [#allocation4]
    $region29: #{tpu_custom_call.1} parent=1 // pred_fallthru
      _
    // Predicated region
    $region30: #{tpu_custom_call.1} parent=1 // pred_check
      _
    $region31: #{tpu_custom_call.1} parent=1 // pred_check_branch
      %330 = sbr.rel (0) target = $region33
    $region32: #{tpu_custom_call.1} parent=1 // pred_region
      %332 = dma.done [#allocation4], 128
    $region33: #{tpu_custom_call.1} parent=1 // pred_fallthru
      _
    %333 = vsyncpa [#allocation3], 1
    %334 = vsyncpa [#allocation6], 1
    %335 = vsyncpa [#allocation4], 1

</llo_original>
